<compile_context>
chip_gen: v7x
topology: tpu7x:2x2x1
jax: 0.10.0
libtpu: 0.0.40
codegen_flags: <defaults>
</compile_context>

<pallas_src>
import jax
import jax.numpy as jnp
from jax.experimental import pallas as pl
from jax.experimental.pallas import tpu as pltpu


_ONE_SIXTH = 1.0 / 6.0


def _hsigmoid_kernel(x_ref, o_ref):
    # Whole-tile load, elementwise VPU math in native dtype, lane-dense store.
    x = x_ref[...]
    y = jnp.minimum(jnp.maximum(x + 3.0, 0.0), 6.0) * _ONE_SIXTH
    o_ref[...] = y.astype(o_ref.dtype)


# Tiling knobs.
_TARGET_BLOCK_ELEMS = 1024 * 1024   # ~4 MiB of f32 per block (16 MiB live, 2 bufs in+out)
_MIN_GRID_BLOCKS = 4                # keep both v7x TensorCores fed + pipelined


def _round_up(v: int, m: int) -> int:
    return ((v + m - 1) // m) * m


def hsigmoid(x: jax.Array) -> jax.Array:
    """Elementwise hard-sigmoid matching ofa Hsigmoid.forward for any shape."""
    orig_shape = x.shape
    dtype = x.dtype
    n = x.size
    itemsize = jnp.dtype(dtype).itemsize

    # Widest lane tile (multiple of 128) that divides n -> pad-free hot path.
    lane = None
    for cand in (1024, 512, 256, 128):
        if n % cand == 0:
            lane = cand
            break

    flat = x.reshape(-1)
    if lane is None:
        # Rare ragged case: pad only to the next multiple of 128.
        lane = 128
        padded = _round_up(n, lane)
        flat = jnp.pad(flat, (0, padded - n))
    else:
        padded = n

    rows = padded // lane
    x2d = flat.reshape(rows, lane)

    # Row tile: multiple of 8 (or equal to the full row extent), sized so one
    # block is ~4 MiB of f32 and the grid has >= _MIN_GRID_BLOCKS steps when
    # there are enough rows. Ragged last block is handled by Pallas.
    row_tile_max = max(8, _TARGET_BLOCK_ELEMS // lane)
    if rows <= 8:
        row_tile = rows                      # full-extent block is always legal
    else:
        row_tile = min(
            row_tile_max,
            max(8, _round_up(pl.cdiv(rows, _MIN_GRID_BLOCKS), 8)),
        )
    grid = (pl.cdiv(rows, row_tile),)

    out2d = pl.pallas_call(
        _hsigmoid_kernel,
        out_shape=jax.ShapeDtypeStruct((rows, lane), dtype),
        grid=grid,
        in_specs=[pl.BlockSpec((row_tile, lane), lambda i: (i, 0))],
        out_specs=pl.BlockSpec((row_tile, lane), lambda i: (i, 0)),
        input_output_aliases={0: 0},
        compiler_params=pltpu.CompilerParams(
            dimension_semantics=("parallel",),
            vmem_limit_bytes=32 * 1024 * 1024,
        ),
        cost_estimate=pl.CostEstimate(
            flops=3 * padded,                      # add, clip, mul per element
            transcendentals=0,
            bytes_accessed=2 * padded * itemsize,  # pure bandwidth op
        ),
    )(x2d)

    if padded != n:
        return out2d.reshape(-1)[:n].reshape(orig_shape)
    return out2d.reshape(orig_shape)


def _reference_hsigmoid(x: jax.Array) -> jax.Array:
    # Pure-JAX reference mirroring the PyTorch forward: F.relu6(x + 3.0) / 6.0
    return jnp.clip(x + 3.0, 0.0, 6.0) / 6.0


if __name__ == "__main__":
    # Hsigmoid has no learnable parameters.
    B, C, H, W = 2, 4, 16, 16

    key = jax.random.PRNGKey(0)
    # Scale so inputs exercise both saturation regions of relu6(x + 3).
    x = jax.random.normal(key, (B, C, H, W), dtype=jnp.float32) * 4.0

    ref = _reference_hsigmoid(x)
    out = hsigmoid(x)
    out = jax.block_until_ready(out)

    assert out.shape == ref.shape and out.dtype == ref.dtype
    # Multiply-by-1/6 instead of divide-by-6 differs from the reference by ~1 ulp.
    assert jnp.allclose(out, ref, atol=2e-6, rtol=2e-6), "Pallas Hsigmoid mismatch vs reference"

    # Also exercise the ragged (padded) fallback path once, at a tiny size.
    x_ragged = jax.random.normal(jax.random.PRNGKey(1), (3, 5, 7), dtype=jnp.float32) * 4.0
    out_r = jax.block_until_ready(hsigmoid(x_ragged))
    assert jnp.allclose(out_r, _reference_hsigmoid(x_ragged), atol=2e-6, rtol=2e-6)

    print("KERNEL_OK")
</pallas_src>

<mosaic_0001>
module attributes {stable_mosaic.version = 11 : i64} {
  func.func @_hsigmoid_kernel(%arg0: i32, %arg1: memref<2x1024xf32, #tpu.memory_space<vmem>>, %arg2: memref<2x1024xf32, #tpu.memory_space<vmem>>) attributes {dimension_semantics = [#tpu.dimension_semantics<parallel>], iteration_bounds = array<i64: 1>, scalar_prefetch = 0 : i64, scratch_operands = 0 : i64, tpu.core_type = #tpu.core_type<tc>, window_params = [{transform_indices = @transform_0, window_bounds = array<i64: 2, 1024>}, {transform_indices = @transform_1, window_bounds = array<i64: 2, 1024>}]} {
    %c0 = arith.constant 0 : index
    %c0_0 = arith.constant 0 : index
    %0 = vector.load %arg1[%c0, %c0_0] : memref<2x1024xf32, #tpu.memory_space<vmem>>, vector<2x1024xf32>
    %cst = arith.constant 3.000000e+00 : f32
    %1 = vector.broadcast %cst : f32 to vector<2x1024xf32>
    %2 = arith.addf %0, %1 : vector<2x1024xf32>
    %cst_1 = arith.constant 0.000000e+00 : f32
    %3 = vector.broadcast %cst_1 : f32 to vector<2x1024xf32>
    %4 = arith.maximumf %2, %3 : vector<2x1024xf32>
    %cst_2 = arith.constant 6.000000e+00 : f32
    %5 = vector.broadcast %cst_2 : f32 to vector<2x1024xf32>
    %6 = arith.minimumf %4, %5 : vector<2x1024xf32>
    %cst_3 = arith.constant 0.166666672 : f32
    %7 = vector.broadcast %cst_3 : f32 to vector<2x1024xf32>
    %8 = arith.mulf %6, %7 : vector<2x1024xf32>
    %c0_4 = arith.constant 0 : index
    %c0_5 = arith.constant 0 : index
    %9 = vector.load %arg2[%c0_4, %c0_5] : memref<2x1024xf32, #tpu.memory_space<vmem>>, vector<2x1024xf32>
    tpu.vector_store %arg2[%c0_4, %c0_5], %8 {strides = array<i32>} : memref<2x1024xf32, #tpu.memory_space<vmem>>, vector<2x1024xf32>,
    return
  }
  func.func @transform_0(%arg0: i32) -> (i32, i32) {
    %c0_i32 = arith.constant 0 : i32
    %c0_i32_0 = arith.constant 0 : i32
    return %arg0, %c0_i32 : i32, i32
  }
  func.func @transform_1(%arg0: i32) -> (i32, i32) {
    %c0_i32 = arith.constant 0 : i32
    %c0_i32_0 = arith.constant 0 : i32
    return %arg0, %c0_i32 : i32, i32
  }
}

</mosaic_0001>

<llo_original>
// kernel: tpu_custom_call.1
$region0: #{tpu_custom_call.1}
  #allocation0 [shape = 'u32[]', space=smem, size = 0x4, offset = 0x4, fixed_abs, tag = 'smem constant byte address 0x4 - core index']
  #allocation1 [shape = 'u32[144,128]{1,0:T(1,128)}', space=vmem, size = 0x12000, scoped, tag = 'internal scratch']
  %s0 = inlined_call_operand.hbm [shape: f32[2,1024], index: 0, kind: input, shape index: {}, may-alias: {0,1}]
  %s1 = inlined_call_operand.hbm [shape: f32[2,1024], index: 1, kind: output, shape index: {}, may-alias: {0,1}]
  %s2 = sld [smem:[#allocation0]]
  $region18: #{tpu_custom_call.1} parent=0
    _
  %s4 = ssub.s32 1, %s2
  %s5 = scalar_select 0, %s4, %s2
  $region1: #{tpu_custom_call.1} parent=0
    #allocation2 [shape = 'u8[8192]{0}', space=vmem, size = 0x2000, scoped, tag = 'input window, operand 0, single buffered']
    #allocation3 [shape = 's32[1]{0}', space=sflag, size = 0x4, scoped, tag = 'scoped memory for tpu_custom_call.1']
    #allocation4 [shape = 's32[1]{0}', space=sflag, size = 0x4, scoped, tag = 'scoped memory for tpu_custom_call.1']
    #allocation5 [shape = 'u8[8192]{0}', space=vmem, size = 0x2000, scoped, tag = 'output window, operand 0, single buffered']
    %6 = vsyncpa [#allocation3], 0
    %7 = vsyncpa [#allocation4], 0
    // Predicated region
    $region2: #{tpu_custom_call.1} parent=1 // pred_check
      _
    $region3: #{tpu_custom_call.1} parent=1 // pred_check_branch
      %9 = sbr.rel (0) target = $region5
    $region4: #{tpu_custom_call.1} parent=1 // pred_region
      %s11 = ssub.s32 256, 256
      %12 = vsyncadd [#allocation3], %s11
      %s14 = sshll.u32 [#allocation2], 4
      %s15 = int_to_ptr.vmem [resolvable:$true] %s14
      %17 = dma.hbm_to_vmem [thread:$0]  %s0, 256, %s15, [#allocation3]
    $region5: #{tpu_custom_call.1} parent=1 // pred_fallthru
      _
    // Predicated region
    $region6: #{tpu_custom_call.1} parent=1 // pred_check
      _
    $region7: #{tpu_custom_call.1} parent=1 // pred_check_branch
      %19 = sbr.rel (0) target = $region9
    $region8: #{tpu_custom_call.1} parent=1 // pred_region
      %20 = dma.done [#allocation3], 256
    $region9: #{tpu_custom_call.1} parent=1 // pred_fallthru
      _
    %v21 = vld [vmem:[#allocation2] sm:$0xff]
    %v22 = vld [vmem:[#allocation2 + $0x8] sm:$0xff]
    %v23 = vadd.f32 %v21, 3.0
    %v24 = vadd.f32 %v22, 3.0
    %v25 = vmax.f32 %v23, 0.0
    %v26 = vmax.f32 %v24, 0.0
    %v27 = vmin.f32 %v25, 6.0
    %v28 = vmin.f32 %v26, 6.0
    %v29 = vmul.f32 %v27, 0.16666667
    %v30 = vmul.f32 %v28, 0.16666667
    %31 = vst [vmem:[#allocation5] sm:$0xff] %v29
    %32 = vst [vmem:[#allocation5 + $0x8] sm:$0xff] %v30
    // Predicated region
    $region10: #{tpu_custom_call.1} parent=1 // pred_check
      _
    $region11: #{tpu_custom_call.1} parent=1 // pred_check_branch
      %34 = sbr.rel (0) target = $region13
    $region12: #{tpu_custom_call.1} parent=1 // pred_region
      %s36 = ssub.s32 256, 256
      %37 = vsyncadd [#allocation4], %s36
      %s39 = sshll.u32 [#allocation5], 4
      %s40 = int_to_ptr.vmem [resolvable:$true] %s39
      %42 = dma.vmem_to_hbm [thread:$0]  %s40, 256, %s1, [#allocation4]
    $region13: #{tpu_custom_call.1} parent=1 // pred_fallthru
      _
    // Predicated region
    $region14: #{tpu_custom_call.1} parent=1 // pred_check
      _
    $region15: #{tpu_custom_call.1} parent=1 // pred_check_branch
      %44 = sbr.rel (0) target = $region17
    $region16: #{tpu_custom_call.1} parent=1 // pred_region
      %45 = dma.done [#allocation4], 256
    $region17: #{tpu_custom_call.1} parent=1 // pred_fallthru
      _
    %46 = vsyncpa [#allocation3], 1
    %47 = vsyncpa [#allocation4], 1

</llo_original>
